<compile_context>
chip_gen: v7x
topology: tpu7x:2x2x1
jax: 0.10.0
libtpu: 0.0.40
codegen_flags: <defaults>
</compile_context>

<pallas_src>
import functools

import jax
import jax.numpy as jnp
from jax.experimental import pallas as pl
from jax.experimental.pallas import tpu as pltpu

_LANES = 128
# Sublane packing multiple by element size: f32 -> 8, bf16/f16 -> 16, int8/fp8 -> 32.
_SUBLANE_BY_ITEMSIZE = {4: 8, 2: 16, 1: 32}
_MIB = 1024 * 1024
_SMALL_FALLBACK_BYTES = 512 * 1024  # below this, skip pallas_call entirely


def _h_sigmoid_math(x):
    # relu6(x + 3) / 6 == clip(x * (1/6) + 0.5, 0, 1); mul instead of divide,
    # compute in f32, cast back to the input dtype.
    xf = x.astype(jnp.float32)
    return jnp.clip(xf * (1.0 / 6.0) + 0.5, 0.0, 1.0).astype(x.dtype)


def _h_sigmoid_kernel(x_ref, o_ref):
    o_ref[...] = _h_sigmoid_math(x_ref[...])


@functools.lru_cache(maxsize=1)
def _tpu_config():
    """Returns (tensorcores_per_chip, vmem_capacity_bytes), conservatively."""
    num_tc = 1
    vmem_bytes = 64 * _MIB  # v7x has the smallest per-TC VMEM; safe default
    try:
        info = pltpu.get_tpu_info()
        vmem_bytes = int(getattr(info, "vmem_capacity_bytes", vmem_bytes))
        for name in ("num_cores", "num_tensorcores", "tensorcores_per_chip"):
            v = getattr(info, name, None)
            if v:
                num_tc = int(v)
                break
    except Exception:
        pass
    if num_tc == 1:
        try:
            kind = jax.devices()[0].device_kind.lower()
            if "v7" in kind:  # v7x: 2 TensorCores per chip
                num_tc = 2
        except Exception:
            pass
    return num_tc, vmem_bytes


def h_sigmoid(x, *, target_block_bytes=None, force_pallas=False):
    """Elementwise hard-sigmoid: relu6(x + 3) / 6 (matches the PyTorch module)."""
    orig_shape = x.shape
    dtype = x.dtype
    n = x.size
    if n == 0:
        return x

    itemsize = jnp.dtype(dtype).itemsize
    total_bytes = n * itemsize

    # Tiny activations: pallas_call launch + DMA setup dominates; XLA's fused
    # elementwise is strictly faster.
    if (not force_pallas and total_bytes < _SMALL_FALLBACK_BYTES) or n < _LANES:
        return _h_sigmoid_math(x)

    num_tc, vmem_cap = _tpu_config()
    sublane = _SUBLANE_BY_ITEMSIZE.get(itemsize, 8)

    if target_block_bytes is None:
        # Large tiles amortize the ~0.35 us per-grid-step overhead. Keep
        # 4 double-buffers x tile well under the chip's VMEM (v7x: 64 MiB).
        target_block_bytes = 8 * _MIB if vmem_cap >= 96 * _MIB else 6 * _MIB

    # ---- 128-aligned prefix (kernel) + short tail (plain jnp, no extra pass) ----
    flat = x.reshape(-1)
    aligned = n - (n % _LANES)
    prefix = flat[:aligned] if aligned != n else flat

    cols = _LANES
    for cand in (4096, 2048, 1024, 512, 256):
        if aligned % cand == 0:
            cols = cand
            break
    rows = aligned // cols
    slab = prefix.reshape(rows, cols)

    # ---- row tile: dtype-aligned sublanes, generation-aware size ----
    row_tile = max(sublane, target_block_bytes // (cols * itemsize))
    row_tile = (row_tile // sublane) * sublane
    if row_tile >= rows:
        # Whole slab in one block; block dim == full dim is always legal.
        row_tile = rows
    if num_tc > 1 and pl.cdiv(rows, row_tile) < num_tc and rows >= num_tc * sublane:
        # v7x only: keep both TensorCores busy. Identical tiles balance perfectly;
        # use exactly num_tc steps (not 8) to avoid extra per-step overhead.
        row_tile = pl.cdiv(pl.cdiv(rows, num_tc), sublane) * sublane

    grid = (pl.cdiv(rows, row_tile),)

    tile_bytes = row_tile * cols * itemsize
    # 2x input + 2x output double buffers + headroom, capped below physical VMEM.
    vmem_limit = 4 * tile_bytes + 8 * _MIB
    vmem_limit = int(max(16 * _MIB, min(vmem_limit, (vmem_cap * 3) // 4)))

    out = pl.pallas_call(
        _h_sigmoid_kernel,
        out_shape=jax.ShapeDtypeStruct((rows, cols), dtype),
        grid=grid,
        in_specs=[pl.BlockSpec((row_tile, cols), lambda i: (i, 0))],
        out_specs=pl.BlockSpec((row_tile, cols), lambda i: (i, 0)),
        compiler_params=pltpu.CompilerParams(
            dimension_semantics=("parallel",),
            vmem_limit_bytes=vmem_limit,
        ),
    )(slab)

    if aligned != n:
        tail_out = _h_sigmoid_math(flat[aligned:])
        return jnp.concatenate([out.reshape(-1), tail_out]).reshape(orig_shape)
    return out.reshape(orig_shape)


def h_sigmoid_ref(x):
    return jnp.clip(x + 3.0, 0.0, 6.0) / 6.0


if __name__ == "__main__":
    key = jax.random.PRNGKey(0)

    # Primary case: NCHW activation as the PyTorch module would see it.
    # Small, so exercise the Pallas path explicitly via force_pallas.
    x = jax.random.normal(key, (2, 4, 16, 16), dtype=jnp.float32) * 4.0
    y = jax.block_until_ready(h_sigmoid(x, force_pallas=True))
    assert y.shape == x.shape and y.dtype == x.dtype
    assert jnp.allclose(y, h_sigmoid_ref(x), atol=1e-5, rtol=1e-5)

    # Default path (small-size jnp fallback) must agree.
    y_fb = jax.block_until_ready(h_sigmoid(x))
    assert jnp.allclose(y_fb, h_sigmoid_ref(x), atol=1e-5, rtol=1e-5)

    # Ragged size (exercises the 128-aligned prefix + jnp tail path).
    x2 = jax.random.normal(jax.random.PRNGKey(1), (7, 3, 5, 5), dtype=jnp.float32) * 4.0
    y2 = jax.block_until_ready(h_sigmoid(x2, force_pallas=True))
    assert y2.shape == x2.shape
    assert jnp.allclose(y2, h_sigmoid_ref(x2), atol=1e-5, rtol=1e-5)

    # bf16 path (sublane=16 packing).
    x3 = (jax.random.normal(jax.random.PRNGKey(2), (2, 4, 16, 16), dtype=jnp.float32) * 4.0
          ).astype(jnp.bfloat16)
    y3 = jax.block_until_ready(h_sigmoid(x3, force_pallas=True))
    assert y3.dtype == jnp.bfloat16
    assert jnp.allclose(y3.astype(jnp.float32),
                        h_sigmoid_ref(x3.astype(jnp.float32)),
                        atol=1e-2, rtol=1e-2)

    print("KERNEL_OK")
</pallas_src>

<mosaic_0001>
module attributes {stable_mosaic.version = 11 : i64} {
  func.func @_h_sigmoid_kernel(%arg0: i32, %arg1: memref<1x2048xf32, #tpu.memory_space<vmem>>, %arg2: memref<1x2048xf32, #tpu.memory_space<vmem>>) attributes {dimension_semantics = [#tpu.dimension_semantics<parallel>], iteration_bounds = array<i64: 1>, scalar_prefetch = 0 : i64, scratch_operands = 0 : i64, tpu.core_type = #tpu.core_type<tc>, window_params = [{transform_indices = @transform_0, window_bounds = array<i64: 1, 2048>}, {transform_indices = @transform_1, window_bounds = array<i64: 1, 2048>}]} {
    %c0 = arith.constant 0 : index
    %c0_0 = arith.constant 0 : index
    %0 = vector.load %arg1[%c0, %c0_0] : memref<1x2048xf32, #tpu.memory_space<vmem>>, vector<1x2048xf32>
    %cst = arith.constant 0.166666672 : f32
    %1 = vector.broadcast %cst : f32 to vector<1x2048xf32>
    %2 = arith.mulf %0, %1 : vector<1x2048xf32>
    %cst_1 = arith.constant 5.000000e-01 : f32
    %3 = vector.broadcast %cst_1 : f32 to vector<1x2048xf32>
    %4 = arith.addf %2, %3 : vector<1x2048xf32>
    %cst_2 = arith.constant 0.000000e+00 : f32
    %cst_3 = arith.constant 1.000000e+00 : f32
    %5 = vector.broadcast %cst_2 : f32 to vector<1x2048xf32>
    %6 = arith.maximumf %5, %4 : vector<1x2048xf32>
    %7 = vector.broadcast %cst_3 : f32 to vector<1x2048xf32>
    %8 = arith.minimumf %7, %6 : vector<1x2048xf32>
    %c0_4 = arith.constant 0 : index
    %c0_5 = arith.constant 0 : index
    %9 = vector.load %arg2[%c0_4, %c0_5] : memref<1x2048xf32, #tpu.memory_space<vmem>>, vector<1x2048xf32>
    tpu.vector_store %arg2[%c0_4, %c0_5], %8 {strides = array<i32>} : memref<1x2048xf32, #tpu.memory_space<vmem>>, vector<1x2048xf32>,
    return
  }
  func.func @transform_0(%arg0: i32) -> (i32, i32) {
    %c0_i32 = arith.constant 0 : i32
    %c0_i32_0 = arith.constant 0 : i32
    return %arg0, %c0_i32 : i32, i32
  }
  func.func @transform_1(%arg0: i32) -> (i32, i32) {
    %c0_i32 = arith.constant 0 : i32
    %c0_i32_0 = arith.constant 0 : i32
    return %arg0, %c0_i32 : i32, i32
  }
}

</mosaic_0001>

<llo_original>
// kernel: tpu_custom_call.1
$region0: #{tpu_custom_call.1}
  #allocation0 [shape = 'u32[]', space=smem, size = 0x4, offset = 0x4, fixed_abs, tag = 'smem constant byte address 0x4 - core index']
  #allocation1 [shape = 'u32[144,128]{1,0:T(1,128)}', space=vmem, size = 0x12000, scoped, tag = 'internal scratch']
  %s0 = inlined_call_operand.hbm [shape: f32[1,2048], index: 0, kind: input, shape index: {}]
  %s1 = inlined_call_operand.hbm [shape: f32[1,2048], index: 1, kind: output, shape index: {}]
  %s2 = sld [smem:[#allocation0]]
  $region18: #{tpu_custom_call.1} parent=0
    _
  %s4 = ssub.s32 1, %s2
  %s5 = scalar_select 0, %s4, %s2
  $region1: #{tpu_custom_call.1} parent=0
    #allocation2 [shape = 'u8[8192]{0}', space=vmem, size = 0x2000, scoped, tag = 'input window, operand 0, single buffered']
    #allocation3 [shape = 's32[1]{0}', space=sflag, size = 0x4, scoped, tag = 'scoped memory for tpu_custom_call.1']
    #allocation4 [shape = 's32[1]{0}', space=sflag, size = 0x4, scoped, tag = 'scoped memory for tpu_custom_call.1']
    #allocation5 [shape = 'u8[8192]{0}', space=vmem, size = 0x2000, scoped, tag = 'output window, operand 0, single buffered']
    %6 = vsyncpa [#allocation3], 0
    %7 = vsyncpa [#allocation4], 0
    // Predicated region
    $region2: #{tpu_custom_call.1} parent=1 // pred_check
      _
    $region3: #{tpu_custom_call.1} parent=1 // pred_check_branch
      %9 = sbr.rel (0) target = $region5
    $region4: #{tpu_custom_call.1} parent=1 // pred_region
      %s11 = ssub.s32 256, 256
      %12 = vsyncadd [#allocation3], %s11
      %s14 = sshll.u32 [#allocation2], 4
      %s15 = int_to_ptr.vmem [resolvable:$true] %s14
      %17 = dma.hbm_to_vmem [thread:$0]  %s0, 256, %s15, [#allocation3]
    $region5: #{tpu_custom_call.1} parent=1 // pred_fallthru
      _
    // Predicated region
    $region6: #{tpu_custom_call.1} parent=1 // pred_check
      _
    $region7: #{tpu_custom_call.1} parent=1 // pred_check_branch
      %19 = sbr.rel (0) target = $region9
    $region8: #{tpu_custom_call.1} parent=1 // pred_region
      %20 = dma.done [#allocation3], 256
    $region9: #{tpu_custom_call.1} parent=1 // pred_fallthru
      _
    %v21 = vld [vmem:[#allocation2] sm:$0xff]
    %v22 = vld [vmem:[#allocation2 + $0x8] sm:$0xff]
    %v23 = vmul.f32 %v21, 0.16666667
    %v24 = vmul.f32 %v22, 0.16666667
    %v25 = vadd.f32 %v23, 0.5
    %v26 = vadd.f32 %v24, 0.5
    %v27 = vmax.f32 %v25, 0.0
    %v28 = vmax.f32 %v26, 0.0
    %v29 = vmin.f32 %v27, 1.0
    %v30 = vmin.f32 %v28, 1.0
    %31 = vst [vmem:[#allocation5] sm:$0xff] %v29
    %32 = vst [vmem:[#allocation5 + $0x8] sm:$0xff] %v30
    // Predicated region
    $region10: #{tpu_custom_call.1} parent=1 // pred_check
      _
    $region11: #{tpu_custom_call.1} parent=1 // pred_check_branch
      %34 = sbr.rel (0) target = $region13
    $region12: #{tpu_custom_call.1} parent=1 // pred_region
      %s36 = ssub.s32 256, 256
      %37 = vsyncadd [#allocation4], %s36
      %s39 = sshll.u32 [#allocation5], 4
      %s40 = int_to_ptr.vmem [resolvable:$true] %s39
      %42 = dma.vmem_to_hbm [thread:$0]  %s40, 256, %s1, [#allocation4]
    $region13: #{tpu_custom_call.1} parent=1 // pred_fallthru
      _
    // Predicated region
    $region14: #{tpu_custom_call.1} parent=1 // pred_check
      _
    $region15: #{tpu_custom_call.1} parent=1 // pred_check_branch
      %44 = sbr.rel (0) target = $region17
    $region16: #{tpu_custom_call.1} parent=1 // pred_region
      %45 = dma.done [#allocation4], 256
    $region17: #{tpu_custom_call.1} parent=1 // pred_fallthru
      _
    %46 = vsyncpa [#allocation3], 1
    %47 = vsyncpa [#allocation4], 1

</llo_original>
